<compile_context>
chip_gen: v7x
topology: tpu7x:2x2x1
jax: 0.10.0
libtpu: 0.0.40
codegen_flags: <defaults>
</compile_context>

<pallas_src>
import functools

import jax
import jax.numpy as jnp
from jax import lax
from jax.experimental import pallas as pl
from jax.experimental.pallas import tpu as pltpu


def _pick_tile(n, candidates=(512, 256, 128)):
    """Largest candidate tile that divides n, else the full extent."""
    for c in candidates:
        if n % c == 0:
            return c
    return n


# --------------------------------------------------------------------------
# Kernel 1: fused Q/K/V projection (all heads in one wide matmul per tensor).
# --------------------------------------------------------------------------
def _qkv_proj_kernel(x_ref, wq_ref, wk_ref, wv_ref, q_ref, k_ref, v_ref,
                     *, compute_dtype):
    x = x_ref[0].astype(compute_dtype)                      # (ts, H)
    q_ref[0] = jnp.dot(x, wq_ref[...],
                       preferred_element_type=jnp.float32).astype(q_ref.dtype)
    k_ref[0] = jnp.dot(x, wk_ref[...],
                       preferred_element_type=jnp.float32).astype(k_ref.dtype)
    v_ref[0] = jnp.dot(x, wv_ref[...],
                       preferred_element_type=jnp.float32).astype(v_ref.dtype)


# --------------------------------------------------------------------------
# Kernel 2: flash attention (online softmax over KV tiles), per (batch, head).
# --------------------------------------------------------------------------
def _flash_attn_kernel(q_ref, k_ref, v_ref, o_ref, m_sc, l_sc, acc_sc):
    ki = pl.program_id(3)

    @pl.when(ki == 0)
    def _():
        m_sc[...] = jnp.full_like(m_sc, -jnp.inf)
        l_sc[...] = jnp.zeros_like(l_sc)
        acc_sc[...] = jnp.zeros_like(acc_sc)

    q = q_ref[0, 0]                                         # (tq, d)  (scaling pre-folded)
    k = k_ref[0, 0]                                         # (tk, d)
    v = v_ref[0, 0]                                         # (tk, d)

    # scores: contract last dims directly (no explicit k.T / XLU transpose)
    s = lax.dot_general(q, k, (((1,), (1,)), ((), ())),
                        preferred_element_type=jnp.float32)  # (tq, tk)

    m_prev = m_sc[...]
    m_new = jnp.maximum(m_prev, jnp.max(s, axis=-1, keepdims=True))
    alpha = jnp.exp(m_prev - m_new)                          # 0 on first step
    p = jnp.exp(s - m_new)
    l_sc[...] = alpha * l_sc[...] + jnp.sum(p, axis=-1, keepdims=True)
    acc_sc[...] = alpha * acc_sc[...] + jnp.dot(
        p.astype(v.dtype), v, preferred_element_type=jnp.float32)
    m_sc[...] = m_new

    @pl.when(ki == pl.num_programs(3) - 1)
    def _():
        o_ref[0, 0] = (acc_sc[...] *
                       pl.reciprocal(l_sc[...], approx=True)).astype(o_ref.dtype)


# --------------------------------------------------------------------------
# Wrapper: matches CcubedDynamicFlashAttention2.forward (eval, mask=None).
# --------------------------------------------------------------------------
def ccubed_dynamic_flash_attention2(hidden_states, q_w, k_w, v_w, o_w,
                                    num_heads, num_kv_heads, head_dim,
                                    compute_dtype=None):
    """hidden_states: (B, S, H) ; weights in torch nn.Linear (out, in) layout.

    Returns (attn_output (B, S, 1), None) like the PyTorch module.
    """
    B, S, H = hidden_states.shape
    n_rep = num_heads // num_kv_heads
    scaling = head_dim ** -0.5
    if compute_dtype is None:
        compute_dtype = hidden_states.dtype
    d = head_dim

    # torch: y = x @ W.T ; fold the softmax scaling into Wq.
    wq_all = (q_w.T * scaling).astype(compute_dtype)          # (H, nh*d)
    wk_all = k_w.T.astype(compute_dtype)                      # (H, nkv*d)
    wv_all = v_w.T.astype(compute_dtype)                      # (H, nkv*d)

    # ---------------- fused QKV projection ----------------
    ts = _pick_tile(S)
    q_all, k_all, v_all = pl.pallas_call(
        functools.partial(_qkv_proj_kernel, compute_dtype=compute_dtype),
        out_shape=(
            jax.ShapeDtypeStruct((B, S, num_heads * d), compute_dtype),
            jax.ShapeDtypeStruct((B, S, num_kv_heads * d), compute_dtype),
            jax.ShapeDtypeStruct((B, S, num_kv_heads * d), compute_dtype),
        ),
        grid_spec=pltpu.PrefetchScalarGridSpec(
            num_scalar_prefetch=0,
            grid=(B, S // ts),
            in_specs=[
                pl.BlockSpec((1, ts, H), lambda b, si: (b, si, 0)),
                pl.BlockSpec((H, num_heads * d), lambda b, si: (0, 0)),
                pl.BlockSpec((H, num_kv_heads * d), lambda b, si: (0, 0)),
                pl.BlockSpec((H, num_kv_heads * d), lambda b, si: (0, 0)),
            ],
            out_specs=[
                pl.BlockSpec((1, ts, num_heads * d), lambda b, si: (b, si, 0)),
                pl.BlockSpec((1, ts, num_kv_heads * d), lambda b, si: (b, si, 0)),
                pl.BlockSpec((1, ts, num_kv_heads * d), lambda b, si: (b, si, 0)),
            ],
        ),
        compiler_params=pltpu.CompilerParams(
            dimension_semantics=("parallel", "parallel")),
    )(hidden_states, wq_all, wk_all, wv_all)

    # layout plumbing (XLA): (B, S, nh*d) -> (B, nh, S, d) so the attention
    # kernel's last block dim is the full head_dim (lane-dense at d=128).
    q4 = q_all.reshape(B, S, num_heads, d).transpose(0, 2, 1, 3)
    k4 = k_all.reshape(B, S, num_kv_heads, d).transpose(0, 2, 1, 3)
    v4 = v_all.reshape(B, S, num_kv_heads, d).transpose(0, 2, 1, 3)

    # ---------------- flash attention ----------------
    tq = _pick_tile(S, candidates=(256, 128))
    tk = _pick_tile(S, candidates=(512, 256, 128))
    attn = pl.pallas_call(
        _flash_attn_kernel,
        out_shape=jax.ShapeDtypeStruct((B, num_heads, S, d), compute_dtype),
        grid_spec=pltpu.PrefetchScalarGridSpec(
            num_scalar_prefetch=0,
            grid=(B, num_heads, S // tq, S // tk),
            in_specs=[
                pl.BlockSpec((1, 1, tq, d), lambda b, h, qi, ki: (b, h, qi, 0)),
                pl.BlockSpec((1, 1, tk, d),
                             lambda b, h, qi, ki: (b, h // n_rep, ki, 0)),  # GQA
                pl.BlockSpec((1, 1, tk, d),
                             lambda b, h, qi, ki: (b, h // n_rep, ki, 0)),  # GQA
            ],
            out_specs=pl.BlockSpec((1, 1, tq, d),
                                   lambda b, h, qi, ki: (b, h, qi, 0)),
            scratch_shapes=[
                pltpu.VMEM((tq, 1), jnp.float32),   # running max m
                pltpu.VMEM((tq, 1), jnp.float32),   # running sum l
                pltpu.VMEM((tq, d), jnp.float32),   # accumulator
            ],
        ),
        compiler_params=pltpu.CompilerParams(
            dimension_semantics=("parallel", "parallel", "parallel",
                                 "arbitrary")),
    )(q4, k4, v4)

    # final o_proj (nh*d -> 1) GEMV in XLA: keeps all kernel stores lane-dense.
    attn_out = attn.transpose(0, 2, 1, 3).reshape(B, S, num_heads * d)
    out = jnp.einsum("bsk,ok->bso", attn_out.astype(jnp.float32),
                     o_w.astype(jnp.float32))                 # (B, S, 1)

    # output_attentions path not supported by the flash-attn variant.
    return out, None


# --------------------------------------------------------------------------
# Plain-JAX reference (mirrors the PyTorch forward) for verification.
# --------------------------------------------------------------------------
def _reference(hidden_states, q_w, k_w, v_w, o_w, num_heads, num_kv_heads,
               head_dim):
    B, S, H = hidden_states.shape
    n_rep = num_heads // num_kv_heads
    q = hidden_states @ q_w.T
    k = hidden_states @ k_w.T
    v = hidden_states @ v_w.T
    q = q.reshape(B, S, num_heads, head_dim).transpose(0, 2, 1, 3)
    k = k.reshape(B, S, num_kv_heads, head_dim).transpose(0, 2, 1, 3)
    v = v.reshape(B, S, num_kv_heads, head_dim).transpose(0, 2, 1, 3)
    k = jnp.repeat(k, n_rep, axis=1)
    v = jnp.repeat(v, n_rep, axis=1)
    s = jnp.einsum("bhqd,bhkd->bhqk", q, k) * (head_dim ** -0.5)
    p = jax.nn.softmax(s, axis=-1)
    a = jnp.einsum("bhqk,bhkd->bhqd", p, v)
    a = a.transpose(0, 2, 1, 3).reshape(B, S, num_heads * head_dim)
    return a @ o_w.T


if __name__ == "__main__":
    # small config consistent with the module
    B, S, H = 2, 8, 32
    num_heads, num_kv_heads, head_dim = 4, 2, 8

    key = jax.random.PRNGKey(0)
    k0, k1, k2, k3, k4 = jax.random.split(key, 5)
    hidden_states = jax.random.normal(k0, (B, S, H), dtype=jnp.float32)
    # deterministic "nn.Linear" weights (out, in), bias=False
    q_w = jax.random.normal(k1, (num_heads * head_dim, H), dtype=jnp.float32) * 0.05
    k_w = jax.random.normal(k2, (num_kv_heads * head_dim, H), dtype=jnp.float32) * 0.05
    v_w = jax.random.normal(k3, (num_kv_heads * head_dim, H), dtype=jnp.float32) * 0.05
    o_w = jax.random.normal(k4, (1, num_heads * head_dim), dtype=jnp.float32) * 0.05

    out, attn_weights = ccubed_dynamic_flash_attention2(
        hidden_states, q_w, k_w, v_w, o_w, num_heads, num_kv_heads, head_dim)
    out = jax.block_until_ready(out)

    ref = _reference(hidden_states, q_w, k_w, v_w, o_w,
                     num_heads, num_kv_heads, head_dim)
    assert out.shape == (B, S, 1), out.shape
    assert attn_weights is None
    # tolerance covers the EUP approximate-reciprocal softmax normalization
    assert jnp.allclose(out, ref, atol=2e-3, rtol=2e-3), \
        float(jnp.max(jnp.abs(out - ref)))

    print("KERNEL_OK")
</pallas_src>

<mosaic_0001>
module attributes {stable_mosaic.version = 11 : i64} {
  func.func @_qkv_proj_kernel(%arg0: i32, %arg1: i32, %arg2: memref<1x8x32xf32, #tpu.memory_space<vmem>>, %arg3: memref<32x32xf32, #tpu.memory_space<vmem>>, %arg4: memref<32x16xf32, #tpu.memory_space<vmem>>, %arg5: memref<32x16xf32, #tpu.memory_space<vmem>>, %arg6: memref<1x8x32xf32, #tpu.memory_space<vmem>>, %arg7: memref<1x8x16xf32, #tpu.memory_space<vmem>>, %arg8: memref<1x8x16xf32, #tpu.memory_space<vmem>>) attributes {dimension_semantics = [#tpu.dimension_semantics<parallel>, #tpu.dimension_semantics<parallel>], iteration_bounds = array<i64: 2, 1>, scalar_prefetch = 0 : i64, scratch_operands = 0 : i64, tpu.core_type = #tpu.core_type<tc>, window_params = [{transform_indices = @transform_0, window_bounds = array<i64: 1, 8, 32>}, {pipeline_mode = #tpu.pipeline_mode<synchronous>, transform_indices = @transform_1, window_bounds = array<i64: 32, 32>}, {pipeline_mode = #tpu.pipeline_mode<synchronous>, transform_indices = @transform_2, window_bounds = array<i64: 32, 16>}, {pipeline_mode = #tpu.pipeline_mode<synchronous>, transform_indices = @transform_3, window_bounds = array<i64: 32, 16>}, {transform_indices = @transform_4, window_bounds = array<i64: 1, 8, 32>}, {transform_indices = @transform_5, window_bounds = array<i64: 1, 8, 16>}, {transform_indices = @transform_6, window_bounds = array<i64: 1, 8, 16>}]} {
    %c0 = arith.constant 0 : index
    %c0_0 = arith.constant 0 : index
    %c0_1 = arith.constant 0 : index
    %0 = vector.load %arg2[%c0, %c0_0, %c0_1] : memref<1x8x32xf32, #tpu.memory_space<vmem>>, vector<1x8x32xf32>
    %1 = vector.shape_cast %0 : vector<1x8x32xf32> to vector<8x32xf32>
    %c0_2 = arith.constant 0 : index
    %c0_3 = arith.constant 0 : index
    %2 = vector.load %arg3[%c0_2, %c0_3] : memref<32x32xf32, #tpu.memory_space<vmem>>, vector<32x32xf32>
    %cst = arith.constant dense<0.000000e+00> : vector<8x32xf32>
    %3 = tpu.matmul %1, %2, %cst {dimension_numbers = #tpu.dot_dimension_numbers<[1], [0], [0], [1], [0, 0, 1, 1], [], []>} : vector<8x32xf32>, vector<32x32xf32>, vector<8x32xf32> -> vector<8x32xf32>
    %c0_4 = arith.constant 0 : index
    %c0_5 = arith.constant 0 : index
    %c0_6 = arith.constant 0 : index
    %4 = vector.load %arg6[%c0_4, %c0_5, %c0_6] : memref<1x8x32xf32, #tpu.memory_space<vmem>>, vector<1x8x32xf32>
    %5 = vector.shape_cast %4 : vector<1x8x32xf32> to vector<8x32xf32>
    %6 = vector.shape_cast %3 : vector<8x32xf32> to vector<1x8x32xf32>
    tpu.vector_store %arg6[%c0_4, %c0_5, %c0_6], %6 {strides = array<i32>} : memref<1x8x32xf32, #tpu.memory_space<vmem>>, vector<1x8x32xf32>,
    %c0_7 = arith.constant 0 : index
    %c0_8 = arith.constant 0 : index
    %7 = vector.load %arg4[%c0_7, %c0_8] : memref<32x16xf32, #tpu.memory_space<vmem>>, vector<32x16xf32>
    %cst_9 = arith.constant dense<0.000000e+00> : vector<8x16xf32>
    %8 = tpu.matmul %1, %7, %cst_9 {dimension_numbers = #tpu.dot_dimension_numbers<[1], [0], [0], [1], [0, 0, 1, 1], [], []>} : vector<8x32xf32>, vector<32x16xf32>, vector<8x16xf32> -> vector<8x16xf32>
    %c0_10 = arith.constant 0 : index
    %c0_11 = arith.constant 0 : index
    %c0_12 = arith.constant 0 : index
    %9 = vector.load %arg7[%c0_10, %c0_11, %c0_12] : memref<1x8x16xf32, #tpu.memory_space<vmem>>, vector<1x8x16xf32>
    %10 = vector.shape_cast %9 : vector<1x8x16xf32> to vector<8x16xf32>
    %11 = vector.shape_cast %8 : vector<8x16xf32> to vector<1x8x16xf32>
    tpu.vector_store %arg7[%c0_10, %c0_11, %c0_12], %11 {strides = array<i32>} : memref<1x8x16xf32, #tpu.memory_space<vmem>>, vector<1x8x16xf32>,
    %c0_13 = arith.constant 0 : index
    %c0_14 = arith.constant 0 : index
    %12 = vector.load %arg5[%c0_13, %c0_14] : memref<32x16xf32, #tpu.memory_space<vmem>>, vector<32x16xf32>
    %cst_15 = arith.constant dense<0.000000e+00> : vector<8x16xf32>
    %13 = tpu.matmul %1, %12, %cst_15 {dimension_numbers = #tpu.dot_dimension_numbers<[1], [0], [0], [1], [0, 0, 1, 1], [], []>} : vector<8x32xf32>, vector<32x16xf32>, vector<8x16xf32> -> vector<8x16xf32>
    %c0_16 = arith.constant 0 : index
    %c0_17 = arith.constant 0 : index
    %c0_18 = arith.constant 0 : index
    %14 = vector.load %arg8[%c0_16, %c0_17, %c0_18] : memref<1x8x16xf32, #tpu.memory_space<vmem>>, vector<1x8x16xf32>
    %15 = vector.shape_cast %14 : vector<1x8x16xf32> to vector<8x16xf32>
    %16 = vector.shape_cast %13 : vector<8x16xf32> to vector<1x8x16xf32>
    tpu.vector_store %arg8[%c0_16, %c0_17, %c0_18], %16 {strides = array<i32>} : memref<1x8x16xf32, #tpu.memory_space<vmem>>, vector<1x8x16xf32>,
    return
  }
  func.func @transform_0(%arg0: i32, %arg1: i32) -> (i32, i32, i32) {
    %c0_i32 = arith.constant 0 : i32
    %c0_i32_0 = arith.constant 0 : i32
    return %arg0, %arg1, %c0_i32 : i32, i32, i32
  }
  func.func @transform_1(%arg0: i32, %arg1: i32) -> (i32, i32) {
    %c0_i32 = arith.constant 0 : i32
    %c0_i32_0 = arith.constant 0 : i32
    %c0_i32_1 = arith.constant 0 : i32
    return %c0_i32, %c0_i32_0 : i32, i32
  }
  func.func @transform_2(%arg0: i32, %arg1: i32) -> (i32, i32) {
    %c0_i32 = arith.constant 0 : i32
    %c0_i32_0 = arith.constant 0 : i32
    %c0_i32_1 = arith.constant 0 : i32
    return %c0_i32, %c0_i32_0 : i32, i32
  }
  func.func @transform_3(%arg0: i32, %arg1: i32) -> (i32, i32) {
    %c0_i32 = arith.constant 0 : i32
    %c0_i32_0 = arith.constant 0 : i32
    %c0_i32_1 = arith.constant 0 : i32
    return %c0_i32, %c0_i32_0 : i32, i32
  }
  func.func @transform_4(%arg0: i32, %arg1: i32) -> (i32, i32, i32) {
    %c0_i32 = arith.constant 0 : i32
    %c0_i32_0 = arith.constant 0 : i32
    return %arg0, %arg1, %c0_i32 : i32, i32, i32
  }
  func.func @transform_5(%arg0: i32, %arg1: i32) -> (i32, i32, i32) {
    %c0_i32 = arith.constant 0 : i32
    %c0_i32_0 = arith.constant 0 : i32
    return %arg0, %arg1, %c0_i32 : i32, i32, i32
  }
  func.func @transform_6(%arg0: i32, %arg1: i32) -> (i32, i32, i32) {
    %c0_i32 = arith.constant 0 : i32
    %c0_i32_0 = arith.constant 0 : i32
    return %arg0, %arg1, %c0_i32 : i32, i32, i32
  }
}

</mosaic_0001>

<llo_original>
// kernel: tpu_custom_call.1
$region0: #{tpu_custom_call.1}
  #allocation0 [shape = 'u32[]', space=smem, size = 0x4, offset = 0x4, fixed_abs, tag = 'smem constant byte address 0x4 - core index']
  #allocation1 [shape = 'u32[144,128]{1,0:T(1,128)}', space=vmem, size = 0x12000, scoped, tag = 'internal scratch']
  %s0 = inlined_call_operand.vmem [shape: f32[2,8,32], index: 0, kind: input, shape index: {}]
  %s1 = inlined_call_operand.vmem [shape: f32[32,32], index: 1, kind: input, shape index: {}]
  %s2 = inlined_call_operand.vmem [shape: f32[32,16], index: 2, kind: input, shape index: {}]
  %s3 = inlined_call_operand.vmem [shape: f32[32,16], index: 3, kind: input, shape index: {}]
  %s4 = inlined_call_operand.hbm [shape: f32[2,8,32], index: 4, kind: output, shape index: {0}]
  %s5 = inlined_call_operand.hbm [shape: f32[2,8,16], index: 5, kind: output, shape index: {1}]
  %s6 = inlined_call_operand.hbm [shape: f32[2,8,16], index: 6, kind: output, shape index: {2}]
  %7 = xla_tuple %s4, %s5, %s6
  %s8 = sld [smem:[#allocation0]]
  $region65: #{tpu_custom_call.1} parent=0
    _
  %s10 = ssub.s32 1, %s8
  %s11 = scalar_select 0, %s10, %s8
  $region1: #{tpu_custom_call.1} parent=0
    #allocation2 [shape = 'u8[8192]{0}', space=vmem, size = 0x2000, scoped, tag = 'output window, operand 0']
    #allocation3 [shape = 's32[2]{0}', space=sflag, size = 0x8, scoped, tag = 'scoped memory for tpu_custom_call.1']
    #allocation4 [shape = 'u8[8192]{0}', space=vmem, size = 0x2000, scoped, tag = 'output window, operand 1']
    #allocation5 [shape = 's32[2]{0}', space=sflag, size = 0x8, scoped, tag = 'scoped memory for tpu_custom_call.1']
    #allocation6 [shape = 'u8[8192]{0}', space=vmem, size = 0x2000, scoped, tag = 'output window, operand 2']
    %12 = vsyncpa [#allocation3], 0
    %s13 = scalar_lea.sflag [#allocation3], 1
    %14 = vsyncpa %s13, 0
    %15 = vsyncpa [#allocation5], 0
    %s16 = scalar_lea.sflag [#allocation5], 1
    %17 = vsyncpa %s16, 0
    loop: start=0, step=1, limit=4
    $region2: #{tpu_custom_call.1} parent=1 // loop_pre_header
      _
    $region3: #{tpu_custom_call.1} parent=1 // loop_header
      %s19 = sphi 0, %s23
      %p20 = scmp.ge.s32.totalorder %s19, 4
      %s26 = sphi 0, %s38
      %s27 = sphi 0, %s34
      %s28 = sphi 0, %s26
      %s29 = sphi 0, %s27
      %s30 = sphi 0, %s28
      %s31 = sphi 0, %s29
      %s43 = sphi 0, %s45
      %s46 = sphi 0, %s43
      %s47 = sphi 0, %s46
      %s63 = sphi 0, %s47
      %s67 = sphi 0, %s67
      %s69 = sphi 0, %s67
      %s70 = sphi 0, %s69
      %s84 = sphi 0, %s70
      %s88 = sphi 0, %s88
      %s90 = sphi 0, %s88
      %s91 = sphi 0, %s90
      %s105 = sphi 0, %s91
      %s109 = sphi 0, %s109
      %s111 = sphi 0, %s109
      %s112 = sphi 0, %s111
      %s126 = sphi 0, %s112
      %s134 = sphi 0, %s136
      %s137 = sphi 0, %s134
      %s138 = sphi 0, %s137
      %s154 = sphi 0, %s138
      %s162 = sphi 0, %s164
      %s165 = sphi 0, %s162
      %s166 = sphi 0, %s165
      %s182 = sphi 0, %s166
      %s190 = sphi 0, %s192
      %s193 = sphi 0, %s190
      %s194 = sphi 0, %s193
      %s210 = sphi 0, %s194
    $region4: #{tpu_custom_call.1} parent=1 // loop_header_branch
      %22 = sbr.rel (%p20) target = $region8
    $region5: #{tpu_custom_call.1} parent=1 // loop_body
      %s24 = ssub.s32 %s19, 1
      %s25 = ssub.s32 %s19, 2
      %s32 = sadd.s32 1, %s27
      %p33 = scmp.ge.s32.totalorder %s32, 1
      %s34 = scalar_select %p33, 0, %s32
      %s35 = sadd.s32 1, %s26
      %s36 = scalar_select %p33, %s35, %s26
      %p37 = scmp.ge.s32.totalorder %s36, 2
      %s38 = scalar_select %p37, 0, %s36
      %s39 = ssub.s32 %s26, %s38
      %s40 = ssub.s32 %s27, %s34
      %s41 = sor.u32 %s39, %s40
      %p42 = scmp.eq.s32.totalorder %s41, 0
      %s44 = sadd.s32 %s43, 1
      %s45 = scalar_select %p42, %s43, %s44
      %p48 = pneg %p42
      %p49 = scmp.eq.s32.totalorder %s19, 1
      %p50 = por %p48, %p49
      %p51 = scmp.ne.s32.totalorder %s43, %s46
      %p52 = scmp.eq.s32.totalorder %s19, 0
      %p53 = por %p51, %p52
      %p54 = scmp.ne.s32.totalorder %s43, %s46
      %p55 = scmp.eq.s32.totalorder %s24, 1
      %p56 = por %p54, %p55
      %p57 = scmp.ne.s32.totalorder %s46, %s47
      %p58 = scmp.eq.s32.totalorder %s24, 0
      %p59 = por %p57, %p58
      %p60 = scmp.ne.s32.totalorder %s46, %s47
      %p61 = scmp.eq.s32.totalorder %s25, 1
      %p62 = por %p60, %p61
      %p64 = scmp.ne.s32.totalorder %s47, %s63
      %p65 = scmp.eq.s32.totalorder %s25, 0
      %p66 = por %p64, %p65
      %s68 = sadd.s32 %s67, 1
      %p71 = scmp.eq.s32.totalorder %s19, 1
      %p72 = scmp.ne.s32.totalorder %s67, %s69
      %p73 = scmp.eq.s32.totalorder %s19, 0
      %p74 = por %p72, %p73
      %p75 = scmp.ne.s32.totalorder %s67, %s69
      %p76 = scmp.eq.s32.totalorder %s24, 1
      %p77 = por %p75, %p76
      %p78 = scmp.ne.s32.totalorder %s69, %s70
      %p79 = scmp.eq.s32.totalorder %s24, 0
      %p80 = por %p78, %p79
      %p81 = scmp.ne.s32.totalorder %s69, %s70
      %p82 = scmp.eq.s32.totalorder %s25, 1
      %p83 = por %p81, %p82
      %p85 = scmp.ne.s32.totalorder %s70, %s84
      %p86 = scmp.eq.s32.totalorder %s25, 0
      %p87 = por %p85, %p86
      %s89 = sadd.s32 %s88, 1
      %p92 = scmp.eq.s32.totalorder %s19, 1
      %p93 = scmp.ne.s32.totalorder %s88, %s90
      %p94 = scmp.eq.s32.totalorder %s19, 0
      %p95 = por %p93, %p94
      %p96 = scmp.ne.s32.totalorder %s88, %s90
      %p97 = scmp.eq.s32.totalorder %s24, 1
      %p98 = por %p96, %p97
      %p99 = scmp.ne.s32.totalorder %s90, %s91
      %p100 = scmp.eq.s32.totalorder %s24, 0
      %p101 = por %p99, %p100
      %p102 = scmp.ne.s32.totalorder %s90, %s91
      %p103 = scmp.eq.s32.totalorder %s25, 1
      %p104 = por %p102, %p103
      %p106 = scmp.ne.s32.totalorder %s91, %s105
      %p107 = scmp.eq.s32.totalorder %s25, 0
      %p108 = por %p106, %p107
      %s110 = sadd.s32 %s109, 1
      %p113 = scmp.eq.s32.totalorder %s19, 1
      %p114 = scmp.ne.s32.totalorder %s109, %s111
      %p115 = scmp.eq.s32.totalorder %s19, 0
      %p116 = por %p114, %p115
      %p117 = scmp.ne.s32.totalorder %s109, %s111
      %p118 = scmp.eq.s32.totalorder %s24, 1
      %p119 = por %p117, %p118
      %p120 = scmp.ne.s32.totalorder %s111, %s112
      %p121 = scmp.eq.s32.totalorder %s24, 0
      %p122 = por %p120, %p121
      %p123 = scmp.ne.s32.totalorder %s111, %s112
      %p124 = scmp.eq.s32.totalorder %s25, 1
      %p125 = por %p123, %p124
      %p127 = scmp.ne.s32.totalorder %s112, %s126
      %p128 = scmp.eq.s32.totalorder %s25, 0
      %p129 = por %p127, %p128
      %s130 = ssub.s32 %s26, %s38
      %s131 = ssub.s32 %s27, %s34
      %s132 = sor.u32 %s130, %s131
      %p133 = scmp.eq.s32.totalorder %s132, 0
      %s135 = sadd.s32 %s134, 1
      %s136 = scalar_select %p133, %s134, %s135
      %p139 = pneg %p133
      %p140 = scmp.eq.s32.totalorder %s19, 1
      %p141 = por %p139, %p140
      %p142 = scmp.ne.s32.totalorder %s134, %s137
      %p143 = scmp.eq.s32.totalorder %s19, 0
      %p144 = por %p142, %p143
      %p145 = scmp.ne.s32.totalorder %s134, %s137
      %p146 = scmp.eq.s32.totalorder %s24, 1
      %p147 = por %p145, %p146
      %p148 = scmp.ne.s32.totalorder %s137, %s138
      %p149 = scmp.eq.s32.totalorder %s24, 0
      %p150 = por %p148, %p149
      %p151 = scmp.ne.s32.totalorder %s137, %s138
      %p152 = scmp.eq.s32.totalorder %s25, 1
      %p153 = por %p151, %p152
      %p155 = scmp.ne.s32.totalorder %s138, %s154
      %p156 = scmp.eq.s32.totalorder %s25, 0
      %p157 = por %p155, %p156
      %s158 = ssub.s32 %s26, %s38
      %s159 = ssub.s32 %s27, %s34
      %s160 = sor.u32 %s158, %s159
      %p161 = scmp.eq.s32.totalorder %s160, 0
      %s163 = sadd.s32 %s162, 1
      %s164 = scalar_select %p161, %s162, %s163
      %p167 = pneg %p161
      %p168 = scmp.eq.s32.totalorder %s19, 1
      %p169 = por %p167, %p168
      %p170 = scmp.ne.s32.totalorder %s162, %s165
      %p171 = scmp.eq.s32.totalorder %s19, 0
      %p172 = por %p170, %p171
      %p173 = scmp.ne.s32.totalorder %s162, %s165
      %p174 = scmp.eq.s32.totalorder %s24, 1
      %p175 = por %p173, %p174
      %p176 = scmp.ne.s32.totalorder %s165, %s166
      %p177 = scmp.eq.s32.totalorder %s24, 0
      %p178 = por %p176, %p177
      %p179 = scmp.ne.s32.totalorder %s165, %s166
      %p180 = scmp.eq.s32.totalorder %s25, 1
      %p181 = por %p179, %p180
      %p183 = scmp.ne.s32.totalorder %s166, %s182
      %p184 = scmp.eq.s32.totalorder %s25, 0
      %p185 = por %p183, %p184
      %s186 = ssub.s32 %s26, %s38
      %s187 = ssub.s32 %s27, %s34
      %s188 = sor.u32 %s186, %s187
      %p189 = scmp.eq.s32.totalorder %s188, 0
      %s191 = sadd.s32 %s190, 1
      %s192 = scalar_select %p189, %s190, %s191
      %p195 = pneg %p189
      %p196 = scmp.eq.s32.totalorder %s19, 1
      %p197 = por %p195, %p196
      %p198 = scmp.ne.s32.totalorder %s190, %s193
      %p199 = scmp.eq.s32.totalorder %s19, 0
      %p200 = por %p198, %p199
      %p201 = scmp.ne.s32.totalorder %s190, %s193
      %p202 = scmp.eq.s32.totalorder %s24, 1
      %p203 = por %p201, %p202
      %p204 = scmp.ne.s32.totalorder %s193, %s194
      %p205 = scmp.eq.s32.totalorder %s24, 0
      %p206 = por %p204, %p205
      %p207 = scmp.ne.s32.totalorder %s193, %s194
      %p208 = scmp.eq.s32.totalorder %s25, 1
      %p209 = por %p207, %p208
      %p211 = scmp.ne.s32.totalorder %s194, %s210
      %p212 = scmp.eq.s32.totalorder %s25, 0
      %p213 = por %p211, %p212
      %p214 = scmp.le.s32.totalorder 1, %s19
      %p215 = scmp.lt.s32.totalorder %s19, 3
      %p216 = pnand %p214, %p215
      %p217 = pneg %p216
      // Predicated region
      $region9: #{tpu_custom_call.1} parent=5 // pred_check
        _
      $region10: #{tpu_custom_call.1} parent=5 // pred_check_branch
        %219 = sbr.rel (%p216) target = $region12
      $region11: #{tpu_custom_call.1} parent=5 // pred_region
        %s220 = ssub.s32 %s19, 1
        // Predicated region
        $region13: #{tpu_custom_call.1} parent=11 // pred_check
          %p221 = pneg %p80
        $region14: #{tpu_custom_call.1} parent=11 // pred_check_branch
          %223 = sbr.rel (%p221) target = $region16
        $region15: #{tpu_custom_call.1} parent=11 // pred_region
          _
        $region16: #{tpu_custom_call.1} parent=11 // pred_fallthru
          _
        // Predicated region
        $region17: #{tpu_custom_call.1} parent=11 // pred_check
          %p224 = pneg %p101
        $region18: #{tpu_custom_call.1} parent=11 // pred_check_branch
          %226 = sbr.rel (%p224) target = $region20
        $region19: #{tpu_custom_call.1} parent=11 // pred_region
          _
        $region20: #{tpu_custom_call.1} parent=11 // pred_fallthru
          _
        // Predicated region
        $region21: #{tpu_custom_call.1} parent=11 // pred_check
          %p227 = pneg %p122
        $region22: #{tpu_custom_call.1} parent=11 // pred_check_branch
          %229 = sbr.rel (%p227) target = $region24
        $region23: #{tpu_custom_call.1} parent=11 // pred_region
          _
        $region24: #{tpu_custom_call.1} parent=11 // pred_fallthru
          _
      $region12: #{tpu_custom_call.1} parent=5 // pred_fallthru
        _
      %p230 = scmp.lt.s32.totalorder %s19, 2
      // Predicated region
      $region25: #{tpu_custom_call.1} parent=5 // pred_check
        %p231 = pneg %p230
      $region26: #{tpu_custom_call.1} parent=5 // pred_check_branch
        %233 = sbr.rel (%p231) target = $region28
      $region27: #{tpu_custom_call.1} parent=5 // pred_region
        // Predicated region
        $region29: #{tpu_custom_call.1} parent=27 // pred_check
          %p234 = pneg %p53
        $region30: #{tpu_custom_call.1} parent=27 // pred_check_branch
          %236 = sbr.rel (%p234) target = $region32
        $region31: #{tpu_custom_call.1} parent=27 // pred_region
          %p237 = scmp.lt.s32.totalorder %s26, 1
          %s238 = scalar_select %p237, %s26, 1
          %p239 = scmp.lt.s32.totalorder %s27, 0
          %s240 = scalar_select %p239, %s27, 0
          %s241 = sadd.s32 %s240, %s238
          %s242 = smul.addr %s241, 8
          %s243 = scalar_lea.vmem %s0, %s242
        $region32: #{tpu_custom_call.1} parent=27 // pred_fallthru
          _
      $region28: #{tpu_custom_call.1} parent=5 // pred_fallthru
        _
      %p244 = scmp.le.s32.totalorder 1, %s19
      %p245 = scmp.lt.s32.totalorder %s19, 3
      %p246 = pnand %p244, %p245
      %p247 = pneg %p246
      // Predicated region
      $region33: #{tpu_custom_call.1} parent=5 // pred_check
        _
      $region34: #{tpu_custom_call.1} parent=5 // pred_check_branch
        %249 = sbr.rel (%p246) target = $region36
      $region35: #{tpu_custom_call.1} parent=5 // pred_region
        %s250 = ssub.s32 %s19, 1
        %p251 = scmp.lt.s32.totalorder %s28, 1
        %s252 = scalar_select %p251, %s28, 1
        %p253 = scmp.lt.s32.totalorder %s29, 0
        %s254 = scalar_select %p253, %s29, 0
        %s255 = sadd.s32 %s254, %s252
        %s256 = smul.addr %s255, 8
        %s257 = scalar_lea.vmem %s0, %s256
        %p258 = pneg %p59
        %p259 = pneg %p56
        %p260 = pneg %p80
        %p261 = pneg %p77
        %p262 = pneg %p101
        %p263 = pneg %p98
        %p264 = pneg %p122
        %p265 = pneg %p119
        %p266 = pneg %p150
        %p267 = pneg %p147
        %s268 = sand.u32 %s137, 1
        %s269 = scalar_lea.sflag [#allocation3], %s268
        %s270 = sand.u32 %s137, 1
        %s271 = smul.addr %s270, 8
        %s272 = scalar_lea.vmem [#allocation2], %s271
        %p273 = pneg %p178
        %p274 = pneg %p175
        %s275 = sand.u32 %s24, 1
        %s276 = scalar_lea.sflag [#allocation5], %s275
        %s277 = sand.u32 %s165, 1
        %s278 = smul.addr %s277, 8
        %s279 = scalar_lea.vmem [#allocation4], %s278
        %p280 = pneg %p206
        %p281 = pneg %p203
        %s282 = sand.u32 %s24, 1
        %s283 = scalar_lea.sflag [#allocation5], %s282
        %s284 = sand.u32 %s193, 1
        %s285 = smul.addr %s284, 8
        %s286 = scalar_lea.vmem [#allocation6], %s285
        %p287 = scmp.lt.s32.totalorder %s28, 1
        %s288 = scalar_select %p287, %s28, 1
        %p289 = scmp.lt.s32.totalorder %s29, 0
        %s290 = scalar_select %p289, %s29, 0
        %s291 = sadd.s32 %s290, %s288
        %s292 = smul.addr %s291, 8
        %s293 = scalar_lea.vmem %s0, %s292
        %v294 = vld [vmem:[%s293] sm:$0xff]
        %v295 = vld [vmem:[%s1] sm:$0xff]
        %v296 = vld [vmem:[%s1 + $0x8] sm:$0xff]
        %v297 = vld [vmem:[%s1 + $0x10] sm:$0xff]
        %v298 = vld [vmem:[%s1 + $0x18] sm:$0xff]
        %vm299 = vcmask 261120
        %v301 = vsel %vm299, %v294, 0
        %303 = vmatprep.subr.mxu0 0.0
        %304 = vmatpush1.msra.mxu0 %v295
        %305 = vmatprep.subr.mxu0 0.0
        %306 = vmatpush1.msra.mxu0 %v296
        %307 = vmatprep.subr.mxu0 0.0
        %308 = vmatpush1.msra.mxu0 %v297
        %309 = vmatprep.subr.mxu0 0.0
        %310 = vmatpush1.msra.mxu0 %v298
        %311 = vmatprep.subr.mxu0 0.0
        %312 = vmatpush1.msra.mxu0 0.0
        %313 = vmatprep.subr.mxu0 0.0
        %314 = vmatpush1.msra.mxu0 0.0
        %315 = vmatprep.subr.mxu0 0.0
        %316 = vmatpush1.msra.mxu0 0.0
        %317 = vmatprep.subr.mxu0 0.0
        %318 = vmatpush1.msra.mxu0 0.0
        %319 = vmatprep.subr.mxu0 0.0
        %320 = vmatpush1.msra.mxu0 0.0
        %321 = vmatprep.subr.mxu0 0.0
        %322 = vmatpush1.msra.mxu0 0.0
        %323 = vmatprep.subr.mxu0 0.0
        %324 = vmatpush1.msra.mxu0 0.0
        %325 = vmatprep.subr.mxu0 0.0
        %326 = vmatpush1.msra.mxu0 0.0
        %327 = vmatprep.subr.mxu0 0.0
        %328 = vmatpush1.msra.mxu0 0.0
        %329 = vmatprep.subr.mxu0 0.0
        %330 = vmatpush1.msra.mxu0 0.0
        %331 = vmatprep.subr.mxu0 0.0
        %332 = vmatpush1.msra.mxu0 0.0
        %333 = vmatprep.subr.mxu0 0.0
        %334 = vmatpush1.msra.mxu0 0.0
        %335 = vmatprep.subr.mxu0 0.0
        %336 = vmatpush1.msra.mxu0 0.0
        %337 = vmatprep.subr.mxu0 0.0
        %338 = vmatpush1.msra.mxu0 0.0
        %339 = vmatprep.subr.mxu0 0.0
        %340 = vmatpush1.msra.mxu0 0.0
        %341 = vmatprep.subr.mxu0 0.0
        %342 = vmatpush1.msra.mxu0 0.0
        %343 = vmatprep.subr.mxu0 0.0
        %344 = vmatpush1.msra.mxu0 0.0
        %345 = vmatprep.subr.mxu0 0.0
        %346 = vmatpush1.msra.mxu0 0.0
        %347 = vmatprep.subr.mxu0 0.0
        %348 = vmatpush1.msra.mxu0 0.0
        %349 = vmatprep.subr.mxu0 0.0
        %350 = vmatpush1.msra.mxu0 0.0
        %351 = vmatprep.subr.mxu0 0.0
        %352 = vmatpush1.msra.mxu0 0.0
        %353 = vmatprep.subr.mxu0 0.0
        %354 = vmatpush1.msra.mxu0 0.0
        %355 = vmatprep.subr.mxu0 0.0
        %356 = vmatpush1.msra.mxu0 0.0
        %357 = vmatprep.subr.mxu0 0.0
        %358 = vmatpush1.msra.mxu0 0.0
        %359 = vmatprep.subr.mxu0 0.0
        %360 = vmatpush1.msra.mxu0 0.0
        %361 = vmatprep.subr.mxu0 0.0
        %362 = vmatpush1.msra.mxu0 0.0
        %363 = vmatprep.subr.mxu0 0.0
        %364 = vmatpush1.msra.mxu0 0.0
        %365 = vmatprep.subr.mxu0 0.0
        %366 = vmatpush1.msra.mxu0 0.0
        %367 = vmatprep.mubr.f32.mxu0 0.0
        %368 = vmatmul.mubr.f32.gmra.mrb[0].mxu0 %v301
        %v369 = vpop.f32.mrb[0].mxu0
        %v370 = vadd.f32 0.0, %v369
        %v371 = vpop.f32.mrb[0].mxu0
        %372 = vdwg.mxu0
        %373 = vst.msk [vmem:[%s272] sm:$0xff] %vm299, %v370
        %v374 = vld [vmem:[%s2] sm:$0xff]
        %v375 = vld [vmem:[%s2 + $0x8] sm:$0xff]
        %v376 = vld [vmem:[%s2 + $0x10] sm:$0xff]
        %v377 = vld [vmem:[%s2 + $0x18] sm:$0xff]
        %378 = vmatprep.subr.mxu0 0.0
        %379 = vmatpush1.msra.mxu0 %v374
        %380 = vmatprep.subr.mxu0 0.0
        %381 = vmatpush1.msra.mxu0 %v375
        %382 = vmatprep.subr.mxu0 0.0
        %383 = vmatpush1.msra.mxu0 %v376
        %384 = vmatprep.subr.mxu0 0.0
        %385 = vmatpush1.msra.mxu0 %v377
        %386 = vmatprep.subr.mxu0 0.0
        %387 = vmatpush1.msra.mxu0 0.0
        %388 = vmatprep.subr.mxu0 0.0
        %389 = vmatpush1.msra.mxu0 0.0
        %390 = vmatprep.subr.mxu0 0.0
        %391 = vmatpush1.msra.mxu0 0.0
        %392 = vmatprep.subr.mxu0 0.0
        %393 = vmatpush1.msra.mxu0 0.0
        %394 = vmatprep.subr.mxu0 0.0
        %395 = vmatpush1.msra.mxu0 0.0
        %396 = vmatprep.subr.mxu0 0.0
        %397 = vmatpush1.msra.mxu0 0.0
        %398 = vmatprep.subr.mxu0 0.0
        %399 = vmatpush1.msra.mxu0 0.0
        %400 = vmatprep.subr.mxu0 0.0
        %401 = vmatpush1.msra.mxu0 0.0
        %402 = vmatprep.subr.mxu0 0.0
        %403 = vmatpush1.msra.mxu0 0.0
        %404 = vmatprep.subr.mxu0 0.0
        %405 = vmatpush1.msra.mxu0 0.0
        %406 = vmatprep.subr.mxu0 0.0
        %407 = vmatpush1.msra.mxu0 0.0
        %408 = vmatprep.subr.mxu0 0.0
        %409 = vmatpush1.msra.mxu0 0.0
        %410 = vmatprep.subr.mxu0 0.0
        %411 = vmatpush1.msra.mxu0 0.0
        %412 = vmatprep.subr.mxu0 0.0
        %413 = vmatpush1.msra.mxu0 0.0
        %414 = vmatprep.subr.mxu0 0.0
        %415 = vmatpush1.msra.mxu0 0.0
        %416 = vmatprep.subr.mxu0 0.0
        %417 = vmatpush1.msra.mxu0 0.0
        %418 = vmatprep.subr.mxu0 0.0
        %419 = vmatpush1.msra.mxu0 0.0
        %420 = vmatprep.subr.mxu0 0.0
        %421 = vmatpush1.msra.mxu0 0.0
        %422 = vmatprep.subr.mxu0 0.0
        %423 = vmatpush1.msra.mxu0 0.0
        %424 = vmatprep.subr.mxu0 0.0
        %425 = vmatpush1.msra.mxu0 0.0
        %426 = vmatprep.subr.mxu0 0.0
        %427 = vmatpush1.msra.mxu0 0.0
        %428 = vmatprep.subr.mxu0 0.0
        %429 = vmatpush1.msra.mxu0 0.0
        %430 = vmatprep.subr.mxu0 0.0
        %431 = vmatpush1.msra.mxu0 0.0
        %432 = vmatprep.subr.mxu0 0.0
        %433 = vmatpush1.msra.mxu0 0.0
        %434 = vmatprep.subr.mxu0 0.0
        %435 = vmatpush1.msra.mxu0 0.0
        %436 = vmatprep.subr.mxu0 0.0
        %437 = vmatpush1.msra.mxu0 0.0
        %438 = vmatprep.subr.mxu0 0.0
        %439 = vmatpush1.msra.mxu0 0.0
        %440 = vmatprep.subr.mxu0 0.0
        %441 = vmatpush1.msra.mxu0 0.0
        %442 = vmatprep.mubr.f32.mxu0 0.0
        %443 = vmatmul.mubr.f32.gmra.mrb[0].mxu0 %v301
        %v444 = vpop.f32.mrb[0].mxu0
        %v445 = vadd.f32 0.0, %v444
        %v446 = vpop.f32.mrb[0].mxu0
        %447 = vdwg.mxu0
        %vm448 = vcmask 130048
        %449 = vst.msk [vmem:[%s279] sm:$0xff] %vm448, %v445
        %v450 = vld [vmem:[%s3] sm:$0xff]
        %v451 = vld [vmem:[%s3 + $0x8] sm:$0xff]
        %v452 = vld [vmem:[%s3 + $0x10] sm:$0xff]
        %v453 = vld [vmem:[%s3 + $0x18] sm:$0xff]
        %454 = vmatprep.subr.mxu0 0.0
        %455 = vmatpush1.msra.mxu0 %v450
        %456 = vmatprep.subr.mxu0 0.0
        %457 = vmatpush1.msra.mxu0 %v451
        %458 = vmatprep.subr.mxu0 0.0
        %459 = vmatpush1.msra.mxu0 %v452
        %460 = vmatprep.subr.mxu0 0.0
        %461 = vmatpush1.msra.mxu0 %v453
        %462 = vmatprep.subr.mxu0 0.0
        %463 = vmatpush1.msra.mxu0 0.0
        %464 = vmatprep.subr.mxu0 0.0
        %465 = vmatpush1.msra.mxu0 0.0
        %466 = vmatprep.subr.mxu0 0.0
        %467 = vmatpush1.msra.mxu0 0.0
        %468 = vmatprep.subr.mxu0 0.0
        %469 = vmatpush1.msra.mxu0 0.0
        %470 = vmatprep.subr.mxu0 0.0
        %471 = vmatpush1.msra.mxu0 0.0
        %472 = vmatprep.subr.mxu0 0.0
        %473 = vmatpush1.msra.mxu0 0.0
        %474 = vmatprep.subr.mxu0 0.0
        %475 = vmatpush1.msra.mxu0 0.0
        %476 = vmatprep.subr.mxu0 0.0
        %477 = vmatpush1.msra.mxu0 0.0
        %478 = vmatprep.subr.mxu0 0.0
        %479 = vmatpush1.msra.mxu0 0.0
        %480 = vmatprep.subr.mxu0 0.0
        %481 = vmatpush1.msra.mxu0 0.0
        %482 = vmatprep.subr.mxu0 0.0
        %483 = vmatpush1.msra.mxu0 0.0
        %484 = vmatprep.subr.mxu0 0.0
        %485 = vmatpush1.msra.mxu0 0.0
        %486 = vmatprep.subr.mxu0 0.0
        %487 = vmatpush1.msra.mxu0 0.0
        %488 = vmatprep.subr.mxu0 0.0
        %489 = vmatpush1.msra.mxu0 0.0
        %490 = vmatprep.subr.mxu0 0.0
        %491 = vmatpush1.msra.mxu0 0.0
        %492 = vmatprep.subr.mxu0 0.0
        %493 = vmatpush1.msra.mxu0 0.0
        %494 = vmatprep.subr.mxu0 0.0
        %495 = vmatpush1.msra.mxu0 0.0
        %496 = vmatprep.subr.mxu0 0.0
        %497 = vmatpush1.msra.mxu0 0.0
        %498 = vmatprep.subr.mxu0 0.0
        %499 = vmatpush1.msra.mxu0 0.0
        %500 = vmatprep.subr.mxu0 0.0
        %501 = vmatpush1.msra.mxu0 0.0
        %502 = vmatprep.subr.mxu0 0.0
        %503 = vmatpush1.msra.mxu0 0.0
        %504 = vmatprep.subr.mxu0 0.0
        %505 = vmatpush1.msra.mxu0 0.0
        %506 = vmatprep.subr.mxu0 0.0
        %507 = vmatpush1.msra.mxu0 0.0
        %508 = vmatprep.subr.mxu0 0.0
        %509 = vmatpush1.msra.mxu0 0.0
        %510 = vmatprep.subr.mxu0 0.0
        %511 = vmatpush1.msra.mxu0 0.0
        %512 = vmatprep.subr.mxu0 0.0
        %513 = vmatpush1.msra.mxu0 0.0
        %514 = vmatprep.subr.mxu0 0.0
        %515 = vmatpush1.msra.mxu0 0.0
        %516 = vmatprep.subr.mxu0 0.0
        %517 = vmatpush1.msra.mxu0 0.0
        %518 = vmatprep.mubr.f32.mxu0 0.0
        %519 = vmatmul.mubr.f32.gmra.mrb[0].mxu0 %v301
        %v520 = vpop.f32.mrb[0].mxu0
        %v521 = vadd.f32 0.0, %v520
        %v522 = vpop.f32.mrb[0].mxu0
        %523 = vdwg.mxu0
        %524 = vst.msk [vmem:[%s286] sm:$0xff] %vm448, %v521
        %s525 = sand.u32 %s137, 1
        %s526 = scalar_lea.sflag [#allocation3], %s525
        %s527 = sand.u32 %s137, 1
        %s528 = smul.addr %s527, 8
        %s529 = scalar_lea.vmem [#allocation2], %s528
        %s530 = sand.u32 %s24, 1
        %s531 = scalar_lea.sflag [#allocation5], %s530
        %s532 = sand.u32 %s165, 1
        %s533 = smul.addr %s532, 8
        %s534 = scalar_lea.vmem [#allocation4], %s533
        %s535 = sand.u32 %s24, 1
        %s536 = scalar_lea.sflag [#allocation5], %s535
        %s537 = sand.u32 %s193, 1
        %s538 = smul.addr %s537, 8
        %s539 = scalar_lea.vmem [#allocation6], %s538
        // Predicated region
        $region37: #{tpu_custom_call.1} parent=35 // pred_check
          %p540 = pneg %p147
        $region38: #{tpu_custom_call.1} parent=35 // pred_check_branch
          %542 = sbr.rel (%p540) target = $region40
        $region39: #{tpu_custom_call.1} parent=35 // pred_region
          %s544 = ssub.s32 128, 128
          %545 = vsyncadd %s526, %s544
          %s546 = sadd.s32 %s29, %s28
          %s547 = smul.addr %s546, 128
          %s548 = scalar_lea.hbm %s4, %s547
          %s550 = sshll.u32 %s529, 4
          %s551 = int_to_ptr.vmem [resolvable:$true] %s550
          %553 = dma.vmem_to_hbm [thread:$0]  %s551, 128, %s548, %s526
        $region40: #{tpu_custom_call.1} parent=35 // pred_fallthru
          _
        // Predicated region
        $region41: #{tpu_custom_call.1} parent=35 // pred_check
          %p554 = pneg %p175
        $region42: #{tpu_custom_call.1} parent=35 // pred_check_branch
          %556 = sbr.rel (%p554) target = $region44
        $region43: #{tpu_custom_call.1} parent=35 // pred_region
          %s558 = ssub.s32 128, 128
          %559 = vsyncadd %s531, %s558
          %s560 = sadd.s32 %s29, %s28
          %s561 = smul.addr %s560, 128
          %s562 = scalar_lea.hbm %s5, %s561
          %s564 = sshll.u32 %s534, 4
          %s565 = int_to_ptr.vmem [resolvable:$true] %s564
          %567 = dma.vmem_to_hbm [thread:$0]  %s565, 128, %s562, %s531
        $region44: #{tpu_custom_call.1} parent=35 // pred_fallthru
          _
        // Predicated region
        $region45: #{tpu_custom_call.1} parent=35 // pred_check
          %p568 = pneg %p203
        $region46: #{tpu_custom_call.1} parent=35 // pred_check_branch
          %570 = sbr.rel (%p568) target = $region48
        $region47: #{tpu_custom_call.1} parent=35 // pred_region
          %s572 = ssub.s32 128, 128
          %573 = vsyncadd %s536, %s572
          %s574 = sadd.s32 %s29, %s28
          %s575 = smul.addr %s574, 128
          %s576 = scalar_lea.hbm %s6, %s575
          %s578 = sshll.u32 %s539, 4
          %s579 = int_to_ptr.vmem [resolvable:$true] %s578
          %581 = dma.vmem_to_hbm [thread:$0]  %s579, 128, %s576, %s536
        $region48: #{tpu_custom_call.1} parent=35 // pred_fallthru
          _
      $region36: #{tpu_custom_call.1} parent=5 // pred_fallthru
        _
      %p582 = scmp.le.s32.totalorder 2, %s19
      // Predicated region
      $region49: #{tpu_custom_call.1} parent=5 // pred_check
        %p583 = pneg %p582
      $region50: #{tpu_custom_call.1} parent=5 // pred_check_branch
        %585 = sbr.rel (%p583) target = $region52
      $region51: #{tpu_custom_call.1} parent=5 // pred_region
        %s586 = ssub.s32 %s19, 2
        // Predicated region
        $region53: #{tpu_custom_call.1} parent=51 // pred_check
          %p587 = pneg %p153
        $region54: #{tpu_custom_call.1} parent=51 // pred_check_branch
          %589 = sbr.rel (%p587) target = $region56
        $region55: #{tpu_custom_call.1} parent=51 // pred_region
          %s590 = sand.u32 %s138, 1
          %s591 = scalar_lea.sflag [#allocation3], %s590
          %s592 = sand.u32 %s138, 1
          %s593 = smul.addr %s592, 8
          %s594 = scalar_lea.vmem [#allocation2], %s593
          %595 = dma.done %s591, 128
        $region56: #{tpu_custom_call.1} parent=51 // pred_fallthru
          _
        // Predicated region
        $region57: #{tpu_custom_call.1} parent=51 // pred_check
          %p596 = pneg %p181
        $region58: #{tpu_custom_call.1} parent=51 // pred_check_branch
          %598 = sbr.rel (%p596) target = $region60
        $region59: #{tpu_custom_call.1} parent=51 // pred_region
          %s599 = sand.u32 %s25, 1
          %s600 = scalar_lea.sflag [#allocation5], %s599
          %s601 = sand.u32 %s166, 1
          %s602 = smul.addr %s601, 8
          %s603 = scalar_lea.vmem [#allocation4], %s602
          %604 = dma.done %s600, 128
        $region60: #{tpu_custom_call.1} parent=51 // pred_fallthru
          _
        // Predicated region
        $region61: #{tpu_custom_call.1} parent=51 // pred_check
          %p605 = pneg %p209
        $region62: #{tpu_custom_call.1} parent=51 // pred_check_branch
          %607 = sbr.rel (%p605) target = $region64
        $region63: #{tpu_custom_call.1} parent=51 // pred_region
          %s608 = sand.u32 %s25, 1
          %s609 = scalar_lea.sflag [#allocation5], %s608
          %s610 = sand.u32 %s194, 1
          %s611 = smul.addr %s610, 8
          %s612 = scalar_lea.vmem [#allocation6], %s611
          %613 = dma.done %s609, 128
        $region64: #{tpu_custom_call.1} parent=51 // pred_fallthru
          _
      $region52: #{tpu_custom_call.1} parent=5 // pred_fallthru
        _
    $region6: #{tpu_custom_call.1} parent=1 // loop_footer
      %s23 = sadd.s32 1, %s19
    $region7: #{tpu_custom_call.1} parent=1 // loop_footer_branch
      %18 = sbr.rel target = $region3
    $region8: #{tpu_custom_call.1} parent=1 // loop_exit
      _
    %614 = vsyncpa [#allocation3], 1
    %s615 = scalar_lea.sflag [#allocation3], 1
    %616 = vsyncpa %s615, 1
    %617 = vsyncpa [#allocation5], 1
    %s618 = scalar_lea.sflag [#allocation5], 1
    %619 = vsyncpa %s618, 1

</llo_original>
